<compile_context>
chip_gen: v5e
topology: v5e:2x2
jax: 0.10.0
libtpu: 0.0.40
codegen_flags: <defaults>
</compile_context>

<pallas_src>
import jax
import jax.numpy as jnp
from jax.experimental import pallas as pl
from jax.experimental.pallas import tpu as pltpu

LANE = 128
TARGET_BLOCK_BYTES = 4 * 1024 * 1024   # ~4 MiB per input block, any dtype


def _num_splits():
    """2-way leading 'parallel' axis only on dual-TensorCore chips (v7x)."""
    try:
        kind = jax.devices()[0].device_kind.lower()
    except Exception:
        return 1
    return 2 if "7" in kind else 1


def _make_rmse_kernel(tile_rows, blocks_per_split, rows, nblocks, num_splits):
    groups = tile_rows // 8            # tile_rows is always a multiple of 8
    last_block = nblocks - 1
    last_is_partial = (rows % tile_rows) != 0
    has_phantom = (num_splits * blocks_per_split) != nblocks

    def kernel(o_ref, t_ref, out_ref):
        i = pl.program_id(1)

        @pl.when(i == 0)
        def _init():
            out_ref[...] = jnp.zeros_like(out_ref)

        if num_splits > 1:
            logical_block = pl.program_id(0) * blocks_per_split + i
        else:
            logical_block = i

        def accumulate(masked):
            d = o_ref[...].astype(jnp.float32) - t_ref[...].astype(jnp.float32)
            sq = d * d
            if masked:
                # Discard the unspecified padding rows of the partial last
                # block (select, not multiply, so NaN/Inf garbage is dropped).
                # int32 row ids only overflow past ~2.7e11 elements.
                row_start = logical_block * tile_rows
                row_ids = row_start + jax.lax.broadcasted_iota(
                    jnp.int32, (tile_rows, LANE), 0)
                sq = jnp.where(row_ids < rows, sq, 0.0)
            # (groups, 8, 128) summed over axis 0 = pure VPU vreg adds into
            # the resident accumulator block.
            out_ref[0] += sq.reshape(groups, 8, LANE).sum(axis=0)

        if last_is_partial:
            @pl.when(logical_block < last_block)
            def _full():
                accumulate(False)

            @pl.when(logical_block == last_block)
            def _partial():
                accumulate(True)
        elif has_phantom:
            @pl.when(logical_block <= last_block)
            def _full():
                accumulate(False)
        else:
            accumulate(False)

    return kernel


def rmse_loss(output, targets):
    assert output.shape == targets.shape, "RMSELoss requires matching shapes"
    n = output.size                    # static Python int, baked into epilogue
    flat_o = output.reshape(-1)
    flat_t = targets.reshape(-1)

    rows = n // LANE
    n_main = rows * LANE

    sq_sum = jnp.float32(0.0)

    # < 128-element tail (only when n is not a lane multiple): tiny jnp fold.
    if n_main != n:
        o_tail = flat_o[n_main:].astype(jnp.float32)
        t_tail = flat_t[n_main:].astype(jnp.float32)
        sq_sum = sq_sum + jnp.sum(jnp.square(o_tail - t_tail))

    if rows > 0:
        if n_main == n:
            o2 = flat_o.reshape(rows, LANE)          # free reshape
            t2 = flat_t.reshape(rows, LANE)
        else:
            # Prefix slice of the lane-aligned part (cheaper than padding both
            # operands; only hit when n % 128 != 0).
            o2 = flat_o[:n_main].reshape(rows, LANE)
            t2 = flat_t[:n_main].reshape(rows, LANE)

        # Size tiles by bytes: ~4 MiB per input block regardless of dtype
        # (8192 rows f32, 16384 rows bf16).
        bytes_per_row = LANE * (o2.dtype.itemsize + t2.dtype.itemsize)
        max_tile_rows = max(8, ((2 * TARGET_BLOCK_BYTES) // bytes_per_row) // 8 * 8)
        tile_rows = min(max_tile_rows, ((rows + 7) // 8) * 8)

        nblocks = (rows + tile_rows - 1) // tile_rows
        splits = min(_num_splits(), nblocks)
        blocks_per_split = (nblocks + splits - 1) // splits

        if splits * blocks_per_split == nblocks:
            in_map = lambda c, i: (c * blocks_per_split + i, 0)
        else:
            # Clamp the phantom trailing block of the last split so its DMA
            # stays in bounds; its compute is skipped inside the kernel.
            in_map = lambda c, i: (
                jnp.minimum(c * blocks_per_split + i, nblocks - 1), 0)

        partials = pl.pallas_call(
            _make_rmse_kernel(tile_rows, blocks_per_split, rows, nblocks,
                              splits),
            out_shape=jax.ShapeDtypeStruct((splits, 8, LANE), jnp.float32),
            grid=(splits, blocks_per_split),
            in_specs=[
                pl.BlockSpec((tile_rows, LANE), in_map),
                pl.BlockSpec((tile_rows, LANE), in_map),
            ],
            out_specs=pl.BlockSpec((1, 8, LANE), lambda c, i: (c, 0, 0)),
            compiler_params=pltpu.CompilerParams(
                dimension_semantics=("parallel", "arbitrary"),
                vmem_limit_bytes=32 * 1024 * 1024,
            ),
        )(o2, t2)
        sq_sum = sq_sum + jnp.sum(partials)

    # Tiny epilogue outside the kernel: mean over the true N, then sqrt.
    return jnp.sqrt(sq_sum / n)


if __name__ == "__main__":
    key = jax.random.PRNGKey(0)
    k1, k2 = jax.random.split(key)

    # Primary small test (generic NCHW prediction/target pair).
    output = jax.random.normal(k1, (2, 4, 16, 16), dtype=jnp.float32)
    targets = jax.random.normal(k2, (2, 4, 16, 16), dtype=jnp.float32)

    loss = rmse_loss(output, targets)
    jax.block_until_ready(loss)

    ref = jnp.sqrt(jnp.mean(jnp.square(output - targets)))
    assert jnp.allclose(loss, ref, rtol=1e-5, atol=1e-6), (loss, ref)

    # Lane-tail path: element count not a multiple of 128.
    k3, k4 = jax.random.split(k2)
    a = jax.random.normal(k3, (2, 3, 333), dtype=jnp.float32)
    b = jax.random.normal(k4, (2, 3, 333), dtype=jnp.float32)
    l2 = rmse_loss(a, b)
    r2 = jnp.sqrt(jnp.mean(jnp.square(a - b)))
    assert jnp.allclose(l2, r2, rtol=1e-4, atol=1e-6), (l2, r2)

    # bf16 inputs, lane-aligned multi-vreg slab.
    k5, k6 = jax.random.split(k4)
    a16 = jax.random.normal(k5, (8, 3, 128, 128), dtype=jnp.bfloat16)
    b16 = jax.random.normal(k6, (8, 3, 128, 128), dtype=jnp.bfloat16)
    l3 = rmse_loss(a16, b16)
    d3 = a16.astype(jnp.float32) - b16.astype(jnp.float32)
    r3 = jnp.sqrt(jnp.mean(d3 * d3))
    assert jnp.allclose(l3, r3, rtol=1e-4, atol=1e-6), (l3, r3)

    print("KERNEL_OK")
</pallas_src>

<mosaic_0001>
module attributes {stable_mosaic.version = 11 : i64} {
  func.func @kernel(%arg0: i32, %arg1: i32, %arg2: memref<16x128xf32, #tpu.memory_space<vmem>>, %arg3: memref<16x128xf32, #tpu.memory_space<vmem>>, %arg4: memref<1x8x128xf32, #tpu.memory_space<vmem>>) attributes {dimension_semantics = [#tpu.dimension_semantics<parallel>, #tpu.dimension_semantics<arbitrary>], iteration_bounds = array<i64: 1, 1>, scalar_prefetch = 0 : i64, scratch_operands = 0 : i64, tpu.core_type = #tpu.core_type<tc>, window_params = [{transform_indices = @transform_0, window_bounds = array<i64: 16, 128>}, {transform_indices = @transform_1, window_bounds = array<i64: 16, 128>}, {transform_indices = @transform_2, window_bounds = array<i64: 1, 8, 128>}]} {
    %c0_i32 = arith.constant 0 : i32
    %0 = arith.cmpi eq, %arg1, %c0_i32 : i32
    %1 = arith.extui %0 : i1 to i32
    %c0_i32_0 = arith.constant 0 : i32
    %2 = arith.cmpi ne, %1, %c0_i32_0 : i32
    scf.if %2 {
      %cst_10 = arith.constant 0.000000e+00 : f32
      %15 = vector.broadcast %cst_10 : f32 to vector<1x8x128xf32>
      %c0_11 = arith.constant 0 : index
      %c0_12 = arith.constant 0 : index
      %c0_13 = arith.constant 0 : index
      %16 = vector.load %arg4[%c0_11, %c0_12, %c0_13] : memref<1x8x128xf32, #tpu.memory_space<vmem>>, vector<1x8x128xf32>
      tpu.vector_store %arg4[%c0_11, %c0_12, %c0_13], %15 {strides = array<i32>} : memref<1x8x128xf32, #tpu.memory_space<vmem>>, vector<1x8x128xf32>,
    } else {
    }
    %c0 = arith.constant 0 : index
    %c0_1 = arith.constant 0 : index
    %3 = vector.load %arg2[%c0, %c0_1] : memref<16x128xf32, #tpu.memory_space<vmem>>, vector<16x128xf32>
    %c0_2 = arith.constant 0 : index
    %c0_3 = arith.constant 0 : index
    %4 = vector.load %arg3[%c0_2, %c0_3] : memref<16x128xf32, #tpu.memory_space<vmem>>, vector<16x128xf32>
    %5 = arith.subf %3, %4 : vector<16x128xf32>
    %6 = arith.mulf %5, %5 : vector<16x128xf32>
    %c0_4 = arith.constant 0 : index
    %c0_5 = arith.constant 0 : index
    %c0_6 = arith.constant 0 : index
    %7 = vector.load %arg4[%c0_4, %c0_5, %c0_6] : memref<1x8x128xf32, #tpu.memory_space<vmem>>, vector<1x8x128xf32>
    %8 = vector.shape_cast %7 : vector<1x8x128xf32> to vector<8x128xf32>
    %9 = vector.shape_cast %6 : vector<16x128xf32> to vector<2x8x128xf32>
    %cst = arith.constant dense<0.000000e+00> : vector<8x128xf32>
    %10 = vector.multi_reduction <add>, %9, %cst [0] : vector<2x8x128xf32> to vector<8x128xf32>
    %11 = arith.addf %8, %10 : vector<8x128xf32>
    %c0_7 = arith.constant 0 : index
    %c0_8 = arith.constant 0 : index
    %c0_9 = arith.constant 0 : index
    %12 = vector.load %arg4[%c0_7, %c0_8, %c0_9] : memref<1x8x128xf32, #tpu.memory_space<vmem>>, vector<1x8x128xf32>
    %13 = vector.shape_cast %12 : vector<1x8x128xf32> to vector<8x128xf32>
    %14 = vector.shape_cast %11 : vector<8x128xf32> to vector<1x8x128xf32>
    tpu.vector_store %arg4[%c0_7, %c0_8, %c0_9], %14 {strides = array<i32>} : memref<1x8x128xf32, #tpu.memory_space<vmem>>, vector<1x8x128xf32>,
    return
  }
  func.func @transform_0(%arg0: i32, %arg1: i32) -> (i32, i32) {
    %c1_i32 = arith.constant 1 : i32
    %0 = arith.muli %arg0, %c1_i32 : i32
    %1 = arith.addi %0, %arg1 : i32
    %c0_i32 = arith.constant 0 : i32
    %c0_i32_0 = arith.constant 0 : i32
    return %1, %c0_i32 : i32, i32
  }
  func.func @transform_1(%arg0: i32, %arg1: i32) -> (i32, i32) {
    %c1_i32 = arith.constant 1 : i32
    %0 = arith.muli %arg0, %c1_i32 : i32
    %1 = arith.addi %0, %arg1 : i32
    %c0_i32 = arith.constant 0 : i32
    %c0_i32_0 = arith.constant 0 : i32
    return %1, %c0_i32 : i32, i32
  }
  func.func @transform_2(%arg0: i32, %arg1: i32) -> (i32, i32, i32) {
    %c0_i32 = arith.constant 0 : i32
    %c0_i32_0 = arith.constant 0 : i32
    %c0_i32_1 = arith.constant 0 : i32
    return %arg0, %c0_i32, %c0_i32_0 : i32, i32, i32
  }
}

</mosaic_0001>

<llo_original>
// kernel: tpu_custom_call.1
$region0: #{tpu_custom_call.1}
  #allocation0 [shape = 'u32[]', space=smem, size = 0x4, offset = 0x4, fixed_abs, tag = 'smem constant byte address 0x4 - core index']
  #allocation1 [shape = 'u32[72,128]{1,0:T(1,128)}', space=vmem, size = 0x9000, scoped, tag = 'internal scratch']
  %s0 = inlined_call_operand.hbm [shape: f32[16,128], index: 0, kind: input, shape index: {}]
  %s1 = inlined_call_operand.hbm [shape: f32[16,128], index: 1, kind: input, shape index: {}]
  %s2 = inlined_call_operand.hbm [shape: f32[1,8,128], index: 2, kind: output, shape index: {}]
  %s3 = sld [smem:[#allocation0]]
  $region30: #{tpu_custom_call.1} parent=0
    _
  %s5 = ssub.s32 1, %s3
  %s6 = scalar_select 0, %s5, %s3
  $region1: #{tpu_custom_call.1} parent=0
    #allocation2 [shape = 'u8[8192]{0}', space=vmem, size = 0x2000, scoped, tag = 'input window, operand 0, single buffered']
    #allocation3 [shape = 's32[1]{0}', space=sflag, size = 0x4, scoped, tag = 'scoped memory for tpu_custom_call.1']
    #allocation4 [shape = 's32[1]{0}', space=sflag, size = 0x4, scoped, tag = 'scoped memory for tpu_custom_call.1']
    #allocation5 [shape = 'u8[8192]{0}', space=vmem, size = 0x2000, scoped, tag = 'input window, operand 1, single buffered']
    #allocation6 [shape = 's32[1]{0}', space=sflag, size = 0x4, scoped, tag = 'scoped memory for tpu_custom_call.1']
    #allocation7 [shape = 'u8[4096]{0}', space=vmem, size = 0x1000, scoped, tag = 'output window, operand 0, single buffered']
    %7 = vsyncpa [#allocation3], 0
    %8 = vsyncpa [#allocation6], 0
    %9 = vsyncpa [#allocation4], 0
    // Predicated region
    $region2: #{tpu_custom_call.1} parent=1 // pred_check
      _
    $region3: #{tpu_custom_call.1} parent=1 // pred_check_branch
      %11 = sbr.rel (0) target = $region5
    $region4: #{tpu_custom_call.1} parent=1 // pred_region
      %s12 = sadd.s32 0, 0
      %s13 = smul.u32 2, %s12
      %15 = vsyncadd [#allocation3], 0
      %s16 = smul.addr %s13, 8
      %s17 = scalar_lea.hbm %s0, %s16
      %s18 = sshll.u32 %s17, 4
      %s19 = int_to_ptr.hbm [resolvable:$true] %s18
      %s20 = sshll.u32 [#allocation2], 4
      %s21 = int_to_ptr.vmem [resolvable:$true] %s20
      %26 = dma.hbm_to_vmem [thread:$0]  %s19, 256, %s21, [#allocation3], 128, 128, 8
    $region5: #{tpu_custom_call.1} parent=1 // pred_fallthru
      _
    // Predicated region
    $region6: #{tpu_custom_call.1} parent=1 // pred_check
      _
    $region7: #{tpu_custom_call.1} parent=1 // pred_check_branch
      %28 = sbr.rel (0) target = $region9
    $region8: #{tpu_custom_call.1} parent=1 // pred_region
      %s29 = sadd.s32 0, 0
      %s30 = smul.u32 2, %s29
      %32 = vsyncadd [#allocation6], 0
      %s33 = smul.addr %s30, 8
      %s34 = scalar_lea.hbm %s1, %s33
      %s35 = sshll.u32 %s34, 4
      %s36 = int_to_ptr.hbm [resolvable:$true] %s35
      %s37 = sshll.u32 [#allocation5], 4
      %s38 = int_to_ptr.vmem [resolvable:$true] %s37
      %43 = dma.hbm_to_vmem [thread:$0]  %s36, 256, %s38, [#allocation6], 128, 128, 8
    $region9: #{tpu_custom_call.1} parent=1 // pred_fallthru
      _
    // Predicated region
    $region10: #{tpu_custom_call.1} parent=1 // pred_check
      _
    $region11: #{tpu_custom_call.1} parent=1 // pred_check_branch
      %45 = sbr.rel (0) target = $region13
    $region12: #{tpu_custom_call.1} parent=1 // pred_region
      %47 = dma.done [#allocation3], 256
    $region13: #{tpu_custom_call.1} parent=1 // pred_fallthru
      _
    // Predicated region
    $region14: #{tpu_custom_call.1} parent=1 // pred_check
      _
    $region15: #{tpu_custom_call.1} parent=1 // pred_check_branch
      %49 = sbr.rel (0) target = $region17
    $region16: #{tpu_custom_call.1} parent=1 // pred_region
      %51 = dma.done [#allocation6], 256
    $region17: #{tpu_custom_call.1} parent=1 // pred_fallthru
      _
    %s52 = sadd.s32 0, 0
    %s53 = smul.u32 2, %s52
    %s54 = sadd.s32 0, 0
    %s55 = smul.u32 2, %s54
    %p56 = scmp.eq.s32.totalorder 0, 0
    // Predicated region
    $region18: #{tpu_custom_call.1} parent=1 // pred_check
      %p57 = pneg %p56
    $region19: #{tpu_custom_call.1} parent=1 // pred_check_branch
      %59 = sbr.rel (%p57) target = $region21
    $region20: #{tpu_custom_call.1} parent=1 // pred_region
      %60 = vst [vmem:[#allocation7] sm:$0xff] 0.0
    $region21: #{tpu_custom_call.1} parent=1 // pred_fallthru
      _
    %v61 = vld [vmem:[#allocation2] sm:$0xff]
    %v62 = vld [vmem:[#allocation2 + $0x8] sm:$0xff]
    %v63 = vld [vmem:[#allocation5] sm:$0xff]
    %v64 = vld [vmem:[#allocation5 + $0x8] sm:$0xff]
    %v65 = vsub.f32 %v61, %v63
    %v66 = vsub.f32 %v62, %v64
    %v67 = vmul.f32 %v65, %v65
    %v68 = vmul.f32 %v66, %v66
    %v69 = vld [vmem:[#allocation7] sm:$0xff]
    %v70 = vadd.f32 %v67, %v68
    %v71 = vadd.f32 %v69, %v70
    %72 = vst [vmem:[#allocation7] sm:$0xff] %v71
    // Predicated region
    $region22: #{tpu_custom_call.1} parent=1 // pred_check
      _
    $region23: #{tpu_custom_call.1} parent=1 // pred_check_branch
      %74 = sbr.rel (0) target = $region25
    $region24: #{tpu_custom_call.1} parent=1 // pred_region
      %76 = vsyncadd [#allocation4], 0
      %s78 = sshll.u32 [#allocation7], 4
      %s79 = int_to_ptr.vmem [resolvable:$true] %s78
      %s80 = sshll.u32 %s2, 4
      %s81 = int_to_ptr.hbm [resolvable:$true] %s80
      %83 = dma.vmem_to_hbm [thread:$0]  %s79, 128, %s81, [#allocation4]
    $region25: #{tpu_custom_call.1} parent=1 // pred_fallthru
      _
    // Predicated region
    $region26: #{tpu_custom_call.1} parent=1 // pred_check
      _
    $region27: #{tpu_custom_call.1} parent=1 // pred_check_branch
      %85 = sbr.rel (0) target = $region29
    $region28: #{tpu_custom_call.1} parent=1 // pred_region
      %87 = dma.done [#allocation4], 128
    $region29: #{tpu_custom_call.1} parent=1 // pred_fallthru
      _
    %88 = vsyncpa [#allocation3], 1
    %89 = vsyncpa [#allocation6], 1
    %90 = vsyncpa [#allocation4], 1

</llo_original>
